<compile_context>
chip_gen: v7x
topology: tpu7x:2x2x1
jax: 0.10.0
libtpu: 0.0.40
codegen_flags: <defaults>
</compile_context>

<pallas_src>
import functools

import jax
import jax.numpy as jnp
from jax.experimental import pallas as pl
from jax.experimental.pallas import tpu as pltpu


def _round_up(a, m):
    return ((a + m - 1) // m) * m


def _afh_kernel(w_ref, b_ref, x_ref, o_ref, *, C, HW, DK, DKH, NH, NB, SUB):
    # Hoist the tiny qk-conv weights out of all loops: scalar reads from SMEM.
    w = [[w_ref[o * C + c] for c in range(C)] for o in range(2 * DK)]
    b = [b_ref[o] for o in range(2 * DK)]
    inv_nhw = 1.0 / float(NH * HW)
    inv_49 = 1.0 / 49.0

    def process(j, carry):
        s = j * SUB
        if not isinstance(s, int):
            s = pl.multiple_of(s, SUB)
        # Channel-major slabs: batch sub-chunk on sublanes, positions on lanes.
        xs = [x_ref[c, pl.ds(s, SUB), :] for c in range(C)]      # C x (SUB, HW)

        m = jnp.zeros((SUB, HW), jnp.float32)
        for h in range(NH):
            # 1x1 conv rows for this head (q and k) as VPU scalar-broadcast FMAs.
            q_rows, k_rows = [], []
            for d in range(DKH):
                oq = h * DKH + d
                ok = DK + h * DKH + d
                rq = b[oq] + w[oq][0] * xs[0]
                rk = b[ok] + w[ok][0] * xs[0]
                for c in range(1, C):
                    rq = rq + w[oq][c] * xs[c]
                    rk = rk + w[ok][c] * xs[c]
                q_rows.append(rq)
                k_rows.append(rk)

            # L2-normalize over the head dim.  No epsilon (matches the PyTorch
            # reference; a zero q/k head vector yields NaN there too).  The
            # dkh**-0.5 scale on q cancels here so it is not applied.
            qss = q_rows[0] * q_rows[0]
            kss = k_rows[0] * k_rows[0]
            for d in range(1, DKH):
                qss = qss + q_rows[d] * q_rows[d]
                kss = kss + k_rows[d] * k_rows[d]
            inv_q = jax.lax.rsqrt(qss)        # (SUB, HW)
            inv_k = jax.lax.rsqrt(kss)        # (SUB, HW)

            # sum over query positions of (qn^T kn) without forming (HW, HW):
            #   m_h[p] = sum_d (sum_q qn[d, q]) * kn[d, p]
            acc_h = None
            for d in range(DKH):
                qsum_d = jnp.sum(q_rows[d] * inv_q, axis=1, keepdims=True)  # (SUB,1)
                t = qsum_d * k_rows[d]
                acc_h = t if acc_h is None else acc_h + t
            m = m + inv_k * acc_h

        # mean over (heads, query positions); softmax over key positions.
        m = m * inv_nhw
        m = m - jnp.max(m, axis=1, keepdims=True)
        e = jnp.exp(m)
        sm = e * pl.reciprocal(jnp.sum(e, axis=1, keepdims=True), approx=True)

        # Lane-dense stores (HW lanes) on aligned 8-sublane groups.
        for c in range(C):
            o_ref[c, pl.ds(s, SUB), :] = xs[c] * inv_49
            o_ref[C + c, pl.ds(s, SUB), :] = xs[c] * sm
        return carry

    num_chunks = NB // SUB
    if num_chunks == 1:
        process(0, None)
    else:
        jax.lax.fori_loop(0, num_chunks, process, None,
                          unroll=min(2, num_chunks))


def afh_forward(x_nchw, w, b, *, dk, dv, Nh, nb=None):
    """x_nchw: (N, C, H, W) f32.  w: (2*dk+dv, C).  b: (2*dk+dv,) or (2*dk+dv, 1)."""
    N, C, H, W = x_nchw.shape
    HW = H * W
    DKH = dk // Nh
    SUB = 8

    # The dv "v" rows of the qkv conv are never used in this forward path ->
    # slice them off.  Weights/bias go to SMEM as flat scalars.
    w_qk = jnp.asarray(w)[:2 * dk].reshape(2 * dk * C)
    b_qk = jnp.asarray(b)[:2 * dk].reshape(2 * dk)

    # Batch block: big enough to amortize the ~0.35us/step pipeline overhead,
    # but keep several grid steps when N is large (v7x megacore sharding).
    if nb is None:
        nb = min(64, max(SUB, _round_up(pl.cdiv(N, 8), SUB)))
    NB = _round_up(min(_round_up(nb, SUB), _round_up(N, SUB)), SUB)
    N_pad = _round_up(N, NB)

    # Channel-major layout: (C, N, HW) so the kernel sees the batch sub-chunk
    # on sublanes and positions on lanes.  Pad the batch axis by edge
    # replication (padded outputs are sliced off below).
    x_t = jnp.transpose(x_nchw.reshape(N, C, HW), (1, 0, 2))
    if N_pad != N:
        x_t = jnp.pad(x_t, ((0, 0), (0, N_pad - N), (0, 0)), mode="edge")

    in_block = C * NB * HW * 4
    out_block = 2 * C * NB * HW * 4
    vmem_limit = int(min(48 << 20,
                         max(16 << 20, 4 * (in_block + out_block) + (2 << 20))))

    kernel = functools.partial(
        _afh_kernel, C=C, HW=HW, DK=dk, DKH=DKH, NH=Nh, NB=NB, SUB=SUB)

    out_t = pl.pallas_call(
        kernel,
        out_shape=jax.ShapeDtypeStruct((2 * C, N_pad, HW), jnp.float32),
        grid=(N_pad // NB,),
        in_specs=[
            pl.BlockSpec(memory_space=pltpu.MemorySpace.SMEM),   # w (flat scalars)
            pl.BlockSpec(memory_space=pltpu.MemorySpace.SMEM),   # b (flat scalars)
            pl.BlockSpec((C, NB, HW), lambda i: (0, i, 0)),
        ],
        out_specs=pl.BlockSpec((2 * C, NB, HW), lambda i: (0, i, 0)),
        compiler_params=pltpu.CompilerParams(
            dimension_semantics=("parallel",),
            vmem_limit_bytes=vmem_limit),
    )(w_qk, b_qk, x_t)

    out = jnp.transpose(out_t[:, :N, :], (1, 0, 2))
    return out.reshape(N, 2 * C, H, W)


def afh_reference(x_nchw, w, b, *, dk, dv, Nh):
    """Pure-JAX mirror of the eval-mode PyTorch forward (relative=False)."""
    N, C, H, W = x_nchw.shape
    HW = H * W
    dkh = dk // Nh
    xf = x_nchw.reshape(N, C, HW)
    qkv = jnp.einsum("oc,ncp->nop", w, xf) + b[None, :, :]
    q = (qkv[:, :dk] * dkh ** (-0.5)).reshape(N, Nh, dkh, HW)
    k = qkv[:, dk:2 * dk].reshape(N, Nh, dkh, HW)
    qn = q / jnp.linalg.norm(q, axis=2, keepdims=True)
    kn = k / jnp.linalg.norm(k, axis=2, keepdims=True)
    logits = jnp.einsum("nhdp,nhdq->nhpq", qn, kn)
    m = jnp.mean(logits, axis=(1, 2))                 # (N, HW)
    sm = jax.nn.softmax(m, axis=-1)                   # (N, HW)
    y = jnp.concatenate([xf / 49.0, xf * sm[:, None, :]], axis=1)
    return y.reshape(N, 2 * C, H, W)


if __name__ == "__main__":
    # Small shapes consistent with the module; HW = 16*16 = 256 keeps the
    # lane dim a multiple of 128 (dense, unmasked loads/stores).
    N, C, H, W = 2, 4, 16, 16
    dk, dv, Nh = 8, 8, 2
    COUT = 2 * dk + dv

    key = jax.random.PRNGKey(0)
    kx, kw, kb = jax.random.split(key, 3)
    x = jax.random.normal(kx, (N, C, H, W), dtype=jnp.float32)
    # Deterministic synthetic parameters for the 1x1 qkv conv
    # (PyTorch weight (COUT, C, 1, 1) -> (COUT, C); bias (COUT,) -> (COUT, 1)).
    w = jax.random.normal(kw, (COUT, C), dtype=jnp.float32) * 0.1
    b = jax.random.normal(kb, (COUT, 1), dtype=jnp.float32) * 0.1
    # TODO(synk): self.attn_out (Conv2d(1,1,1)) is defined but never used in
    # forward; training-mode label-pairing / supplemental_samples and the
    # relative_logits branch (which samples fresh random params every call)
    # are not implemented.  The hard-coded x/49 divisor mirrors the PyTorch
    # module regardless of H*W.

    out = afh_forward(x, w, b, dk=dk, dv=dv, Nh=Nh)
    out = jax.block_until_ready(out)

    ref = afh_reference(x, w, b, dk=dk, dv=dv, Nh=Nh)
    assert out.shape == (N, 2 * C, H, W)
    assert jnp.allclose(out, ref, atol=1e-5, rtol=2e-3), (
        float(jnp.max(jnp.abs(out - ref))))
    print("KERNEL_OK")
</pallas_src>

<mosaic_0001>
module attributes {stable_mosaic.version = 11 : i64} {
  func.func @_afh_kernel(%arg0: i32, %arg1: memref<64xf32, #tpu.memory_space<smem>>, %arg2: memref<16xf32, #tpu.memory_space<smem>>, %arg3: memref<4x8x256xf32, #tpu.memory_space<vmem>>, %arg4: memref<8x8x256xf32, #tpu.memory_space<vmem>>) attributes {dimension_semantics = [#tpu.dimension_semantics<parallel>], iteration_bounds = array<i64: 1>, scalar_prefetch = 0 : i64, scratch_operands = 0 : i64, tpu.core_type = #tpu.core_type<tc>, window_params = [{transform_indices = @transform_0, window_bounds = array<i64: 64>}, {transform_indices = @transform_1, window_bounds = array<i64: 16>}, {transform_indices = @transform_2, window_bounds = array<i64: 4, 8, 256>}, {transform_indices = @transform_3, window_bounds = array<i64: 8, 8, 256>}]} {
    %c0 = arith.constant 0 : index
    %0 = memref.load %arg1[%c0] : memref<64xf32, #tpu.memory_space<smem>>
    %c1 = arith.constant 1 : index
    %1 = memref.load %arg1[%c1] : memref<64xf32, #tpu.memory_space<smem>>
    %c2 = arith.constant 2 : index
    %2 = memref.load %arg1[%c2] : memref<64xf32, #tpu.memory_space<smem>>
    %c3 = arith.constant 3 : index
    %3 = memref.load %arg1[%c3] : memref<64xf32, #tpu.memory_space<smem>>
    %c4 = arith.constant 4 : index
    %4 = memref.load %arg1[%c4] : memref<64xf32, #tpu.memory_space<smem>>
    %c5 = arith.constant 5 : index
    %5 = memref.load %arg1[%c5] : memref<64xf32, #tpu.memory_space<smem>>
    %c6 = arith.constant 6 : index
    %6 = memref.load %arg1[%c6] : memref<64xf32, #tpu.memory_space<smem>>
    %c7 = arith.constant 7 : index
    %7 = memref.load %arg1[%c7] : memref<64xf32, #tpu.memory_space<smem>>
    %c8 = arith.constant 8 : index
    %8 = memref.load %arg1[%c8] : memref<64xf32, #tpu.memory_space<smem>>
    %c9 = arith.constant 9 : index
    %9 = memref.load %arg1[%c9] : memref<64xf32, #tpu.memory_space<smem>>
    %c10 = arith.constant 10 : index
    %10 = memref.load %arg1[%c10] : memref<64xf32, #tpu.memory_space<smem>>
    %c11 = arith.constant 11 : index
    %11 = memref.load %arg1[%c11] : memref<64xf32, #tpu.memory_space<smem>>
    %c12 = arith.constant 12 : index
    %12 = memref.load %arg1[%c12] : memref<64xf32, #tpu.memory_space<smem>>
    %c13 = arith.constant 13 : index
    %13 = memref.load %arg1[%c13] : memref<64xf32, #tpu.memory_space<smem>>
    %c14 = arith.constant 14 : index
    %14 = memref.load %arg1[%c14] : memref<64xf32, #tpu.memory_space<smem>>
    %c15 = arith.constant 15 : index
    %15 = memref.load %arg1[%c15] : memref<64xf32, #tpu.memory_space<smem>>
    %c16 = arith.constant 16 : index
    %16 = memref.load %arg1[%c16] : memref<64xf32, #tpu.memory_space<smem>>
    %c17 = arith.constant 17 : index
    %17 = memref.load %arg1[%c17] : memref<64xf32, #tpu.memory_space<smem>>
    %c18 = arith.constant 18 : index
    %18 = memref.load %arg1[%c18] : memref<64xf32, #tpu.memory_space<smem>>
    %c19 = arith.constant 19 : index
    %19 = memref.load %arg1[%c19] : memref<64xf32, #tpu.memory_space<smem>>
    %c20 = arith.constant 20 : index
    %20 = memref.load %arg1[%c20] : memref<64xf32, #tpu.memory_space<smem>>
    %c21 = arith.constant 21 : index
    %21 = memref.load %arg1[%c21] : memref<64xf32, #tpu.memory_space<smem>>
    %c22 = arith.constant 22 : index
    %22 = memref.load %arg1[%c22] : memref<64xf32, #tpu.memory_space<smem>>
    %c23 = arith.constant 23 : index
    %23 = memref.load %arg1[%c23] : memref<64xf32, #tpu.memory_space<smem>>
    %c24 = arith.constant 24 : index
    %24 = memref.load %arg1[%c24] : memref<64xf32, #tpu.memory_space<smem>>
    %c25 = arith.constant 25 : index
    %25 = memref.load %arg1[%c25] : memref<64xf32, #tpu.memory_space<smem>>
    %c26 = arith.constant 26 : index
    %26 = memref.load %arg1[%c26] : memref<64xf32, #tpu.memory_space<smem>>
    %c27 = arith.constant 27 : index
    %27 = memref.load %arg1[%c27] : memref<64xf32, #tpu.memory_space<smem>>
    %c28 = arith.constant 28 : index
    %28 = memref.load %arg1[%c28] : memref<64xf32, #tpu.memory_space<smem>>
    %c29 = arith.constant 29 : index
    %29 = memref.load %arg1[%c29] : memref<64xf32, #tpu.memory_space<smem>>
    %c30 = arith.constant 30 : index
    %30 = memref.load %arg1[%c30] : memref<64xf32, #tpu.memory_space<smem>>
    %c31 = arith.constant 31 : index
    %31 = memref.load %arg1[%c31] : memref<64xf32, #tpu.memory_space<smem>>
    %c32 = arith.constant 32 : index
    %32 = memref.load %arg1[%c32] : memref<64xf32, #tpu.memory_space<smem>>
    %c33 = arith.constant 33 : index
    %33 = memref.load %arg1[%c33] : memref<64xf32, #tpu.memory_space<smem>>
    %c34 = arith.constant 34 : index
    %34 = memref.load %arg1[%c34] : memref<64xf32, #tpu.memory_space<smem>>
    %c35 = arith.constant 35 : index
    %35 = memref.load %arg1[%c35] : memref<64xf32, #tpu.memory_space<smem>>
    %c36 = arith.constant 36 : index
    %36 = memref.load %arg1[%c36] : memref<64xf32, #tpu.memory_space<smem>>
    %c37 = arith.constant 37 : index
    %37 = memref.load %arg1[%c37] : memref<64xf32, #tpu.memory_space<smem>>
    %c38 = arith.constant 38 : index
    %38 = memref.load %arg1[%c38] : memref<64xf32, #tpu.memory_space<smem>>
    %c39 = arith.constant 39 : index
    %39 = memref.load %arg1[%c39] : memref<64xf32, #tpu.memory_space<smem>>
    %c40 = arith.constant 40 : index
    %40 = memref.load %arg1[%c40] : memref<64xf32, #tpu.memory_space<smem>>
    %c41 = arith.constant 41 : index
    %41 = memref.load %arg1[%c41] : memref<64xf32, #tpu.memory_space<smem>>
    %c42 = arith.constant 42 : index
    %42 = memref.load %arg1[%c42] : memref<64xf32, #tpu.memory_space<smem>>
    %c43 = arith.constant 43 : index
    %43 = memref.load %arg1[%c43] : memref<64xf32, #tpu.memory_space<smem>>
    %c44 = arith.constant 44 : index
    %44 = memref.load %arg1[%c44] : memref<64xf32, #tpu.memory_space<smem>>
    %c45 = arith.constant 45 : index
    %45 = memref.load %arg1[%c45] : memref<64xf32, #tpu.memory_space<smem>>
    %c46 = arith.constant 46 : index
    %46 = memref.load %arg1[%c46] : memref<64xf32, #tpu.memory_space<smem>>
    %c47 = arith.constant 47 : index
    %47 = memref.load %arg1[%c47] : memref<64xf32, #tpu.memory_space<smem>>
    %c48 = arith.constant 48 : index
    %48 = memref.load %arg1[%c48] : memref<64xf32, #tpu.memory_space<smem>>
    %c49 = arith.constant 49 : index
    %49 = memref.load %arg1[%c49] : memref<64xf32, #tpu.memory_space<smem>>
    %c50 = arith.constant 50 : index
    %50 = memref.load %arg1[%c50] : memref<64xf32, #tpu.memory_space<smem>>
    %c51 = arith.constant 51 : index
    %51 = memref.load %arg1[%c51] : memref<64xf32, #tpu.memory_space<smem>>
    %c52 = arith.constant 52 : index
    %52 = memref.load %arg1[%c52] : memref<64xf32, #tpu.memory_space<smem>>
    %c53 = arith.constant 53 : index
    %53 = memref.load %arg1[%c53] : memref<64xf32, #tpu.memory_space<smem>>
    %c54 = arith.constant 54 : index
    %54 = memref.load %arg1[%c54] : memref<64xf32, #tpu.memory_space<smem>>
    %c55 = arith.constant 55 : index
    %55 = memref.load %arg1[%c55] : memref<64xf32, #tpu.memory_space<smem>>
    %c56 = arith.constant 56 : index
    %56 = memref.load %arg1[%c56] : memref<64xf32, #tpu.memory_space<smem>>
    %c57 = arith.constant 57 : index
    %57 = memref.load %arg1[%c57] : memref<64xf32, #tpu.memory_space<smem>>
    %c58 = arith.constant 58 : index
    %58 = memref.load %arg1[%c58] : memref<64xf32, #tpu.memory_space<smem>>
    %c59 = arith.constant 59 : index
    %59 = memref.load %arg1[%c59] : memref<64xf32, #tpu.memory_space<smem>>
    %c60 = arith.constant 60 : index
    %60 = memref.load %arg1[%c60] : memref<64xf32, #tpu.memory_space<smem>>
    %c61 = arith.constant 61 : index
    %61 = memref.load %arg1[%c61] : memref<64xf32, #tpu.memory_space<smem>>
    %c62 = arith.constant 62 : index
    %62 = memref.load %arg1[%c62] : memref<64xf32, #tpu.memory_space<smem>>
    %c63 = arith.constant 63 : index
    %63 = memref.load %arg1[%c63] : memref<64xf32, #tpu.memory_space<smem>>
    %c0_0 = arith.constant 0 : index
    %64 = memref.load %arg2[%c0_0] : memref<16xf32, #tpu.memory_space<smem>>
    %c1_1 = arith.constant 1 : index
    %65 = memref.load %arg2[%c1_1] : memref<16xf32, #tpu.memory_space<smem>>
    %c2_2 = arith.constant 2 : index
    %66 = memref.load %arg2[%c2_2] : memref<16xf32, #tpu.memory_space<smem>>
    %c3_3 = arith.constant 3 : index
    %67 = memref.load %arg2[%c3_3] : memref<16xf32, #tpu.memory_space<smem>>
    %c4_4 = arith.constant 4 : index
    %68 = memref.load %arg2[%c4_4] : memref<16xf32, #tpu.memory_space<smem>>
    %c5_5 = arith.constant 5 : index
    %69 = memref.load %arg2[%c5_5] : memref<16xf32, #tpu.memory_space<smem>>
    %c6_6 = arith.constant 6 : index
    %70 = memref.load %arg2[%c6_6] : memref<16xf32, #tpu.memory_space<smem>>
    %c7_7 = arith.constant 7 : index
    %71 = memref.load %arg2[%c7_7] : memref<16xf32, #tpu.memory_space<smem>>
    %c8_8 = arith.constant 8 : index
    %72 = memref.load %arg2[%c8_8] : memref<16xf32, #tpu.memory_space<smem>>
    %c9_9 = arith.constant 9 : index
    %73 = memref.load %arg2[%c9_9] : memref<16xf32, #tpu.memory_space<smem>>
    %c10_10 = arith.constant 10 : index
    %74 = memref.load %arg2[%c10_10] : memref<16xf32, #tpu.memory_space<smem>>
    %c11_11 = arith.constant 11 : index
    %75 = memref.load %arg2[%c11_11] : memref<16xf32, #tpu.memory_space<smem>>
    %c12_12 = arith.constant 12 : index
    %76 = memref.load %arg2[%c12_12] : memref<16xf32, #tpu.memory_space<smem>>
    %c13_13 = arith.constant 13 : index
    %77 = memref.load %arg2[%c13_13] : memref<16xf32, #tpu.memory_space<smem>>
    %c14_14 = arith.constant 14 : index
    %78 = memref.load %arg2[%c14_14] : memref<16xf32, #tpu.memory_space<smem>>
    %c15_15 = arith.constant 15 : index
    %79 = memref.load %arg2[%c15_15] : memref<16xf32, #tpu.memory_space<smem>>
    %c0_16 = arith.constant 0 : index
    %c0_17 = arith.constant 0 : index
    %c0_18 = arith.constant 0 : index
    %80 = vector.load %arg3[%c0_16, %c0_17, %c0_18] : memref<4x8x256xf32, #tpu.memory_space<vmem>>, vector<1x8x256xf32>
    %81 = vector.shape_cast %80 : vector<1x8x256xf32> to vector<8x256xf32>
    %c1_19 = arith.constant 1 : index
    %c0_20 = arith.constant 0 : index
    %c0_21 = arith.constant 0 : index
    %82 = vector.load %arg3[%c1_19, %c0_20, %c0_21] : memref<4x8x256xf32, #tpu.memory_space<vmem>>, vector<1x8x256xf32>
    %83 = vector.shape_cast %82 : vector<1x8x256xf32> to vector<8x256xf32>
    %c2_22 = arith.constant 2 : index
    %c0_23 = arith.constant 0 : index
    %c0_24 = arith.constant 0 : index
    %84 = vector.load %arg3[%c2_22, %c0_23, %c0_24] : memref<4x8x256xf32, #tpu.memory_space<vmem>>, vector<1x8x256xf32>
    %85 = vector.shape_cast %84 : vector<1x8x256xf32> to vector<8x256xf32>
    %c3_25 = arith.constant 3 : index
    %c0_26 = arith.constant 0 : index
    %c0_27 = arith.constant 0 : index
    %86 = vector.load %arg3[%c3_25, %c0_26, %c0_27] : memref<4x8x256xf32, #tpu.memory_space<vmem>>, vector<1x8x256xf32>
    %87 = vector.shape_cast %86 : vector<1x8x256xf32> to vector<8x256xf32>
    %cst = arith.constant 0.000000e+00 : f32
    %88 = vector.broadcast %cst : f32 to vector<8x256xf32>
    %89 = vector.broadcast %0 : f32 to vector<8x256xf32>
    %90 = arith.mulf %89, %81 : vector<8x256xf32>
    %91 = vector.broadcast %64 : f32 to vector<8x256xf32>
    %92 = arith.addf %91, %90 : vector<8x256xf32>
    %93 = vector.broadcast %32 : f32 to vector<8x256xf32>
    %94 = arith.mulf %93, %81 : vector<8x256xf32>
    %95 = vector.broadcast %72 : f32 to vector<8x256xf32>
    %96 = arith.addf %95, %94 : vector<8x256xf32>
    %97 = vector.broadcast %1 : f32 to vector<8x256xf32>
    %98 = arith.mulf %97, %83 : vector<8x256xf32>
    %99 = arith.addf %92, %98 : vector<8x256xf32>
    %100 = vector.broadcast %33 : f32 to vector<8x256xf32>
    %101 = arith.mulf %100, %83 : vector<8x256xf32>
    %102 = arith.addf %96, %101 : vector<8x256xf32>
    %103 = vector.broadcast %2 : f32 to vector<8x256xf32>
    %104 = arith.mulf %103, %85 : vector<8x256xf32>
    %105 = arith.addf %99, %104 : vector<8x256xf32>
    %106 = vector.broadcast %34 : f32 to vector<8x256xf32>
    %107 = arith.mulf %106, %85 : vector<8x256xf32>
    %108 = arith.addf %102, %107 : vector<8x256xf32>
    %109 = vector.broadcast %3 : f32 to vector<8x256xf32>
    %110 = arith.mulf %109, %87 : vector<8x256xf32>
    %111 = arith.addf %105, %110 : vector<8x256xf32>
    %112 = vector.broadcast %35 : f32 to vector<8x256xf32>
    %113 = arith.mulf %112, %87 : vector<8x256xf32>
    %114 = arith.addf %108, %113 : vector<8x256xf32>
    %115 = vector.broadcast %4 : f32 to vector<8x256xf32>
    %116 = arith.mulf %115, %81 : vector<8x256xf32>
    %117 = vector.broadcast %65 : f32 to vector<8x256xf32>
    %118 = arith.addf %117, %116 : vector<8x256xf32>
    %119 = vector.broadcast %36 : f32 to vector<8x256xf32>
    %120 = arith.mulf %119, %81 : vector<8x256xf32>
    %121 = vector.broadcast %73 : f32 to vector<8x256xf32>
    %122 = arith.addf %121, %120 : vector<8x256xf32>
    %123 = vector.broadcast %5 : f32 to vector<8x256xf32>
    %124 = arith.mulf %123, %83 : vector<8x256xf32>
    %125 = arith.addf %118, %124 : vector<8x256xf32>
    %126 = vector.broadcast %37 : f32 to vector<8x256xf32>
    %127 = arith.mulf %126, %83 : vector<8x256xf32>
    %128 = arith.addf %122, %127 : vector<8x256xf32>
    %129 = vector.broadcast %6 : f32 to vector<8x256xf32>
    %130 = arith.mulf %129, %85 : vector<8x256xf32>
    %131 = arith.addf %125, %130 : vector<8x256xf32>
    %132 = vector.broadcast %38 : f32 to vector<8x256xf32>
    %133 = arith.mulf %132, %85 : vector<8x256xf32>
    %134 = arith.addf %128, %133 : vector<8x256xf32>
    %135 = vector.broadcast %7 : f32 to vector<8x256xf32>
    %136 = arith.mulf %135, %87 : vector<8x256xf32>
    %137 = arith.addf %131, %136 : vector<8x256xf32>
    %138 = vector.broadcast %39 : f32 to vector<8x256xf32>
    %139 = arith.mulf %138, %87 : vector<8x256xf32>
    %140 = arith.addf %134, %139 : vector<8x256xf32>
    %141 = vector.broadcast %8 : f32 to vector<8x256xf32>
    %142 = arith.mulf %141, %81 : vector<8x256xf32>
    %143 = vector.broadcast %66 : f32 to vector<8x256xf32>
    %144 = arith.addf %143, %142 : vector<8x256xf32>
    %145 = vector.broadcast %40 : f32 to vector<8x256xf32>
    %146 = arith.mulf %145, %81 : vector<8x256xf32>
    %147 = vector.broadcast %74 : f32 to vector<8x256xf32>
    %148 = arith.addf %147, %146 : vector<8x256xf32>
    %149 = vector.broadcast %9 : f32 to vector<8x256xf32>
    %150 = arith.mulf %149, %83 : vector<8x256xf32>
    %151 = arith.addf %144, %150 : vector<8x256xf32>
    %152 = vector.broadcast %41 : f32 to vector<8x256xf32>
    %153 = arith.mulf %152, %83 : vector<8x256xf32>
    %154 = arith.addf %148, %153 : vector<8x256xf32>
    %155 = vector.broadcast %10 : f32 to vector<8x256xf32>
    %156 = arith.mulf %155, %85 : vector<8x256xf32>
    %157 = arith.addf %151, %156 : vector<8x256xf32>
    %158 = vector.broadcast %42 : f32 to vector<8x256xf32>
    %159 = arith.mulf %158, %85 : vector<8x256xf32>
    %160 = arith.addf %154, %159 : vector<8x256xf32>
    %161 = vector.broadcast %11 : f32 to vector<8x256xf32>
    %162 = arith.mulf %161, %87 : vector<8x256xf32>
    %163 = arith.addf %157, %162 : vector<8x256xf32>
    %164 = vector.broadcast %43 : f32 to vector<8x256xf32>
    %165 = arith.mulf %164, %87 : vector<8x256xf32>
    %166 = arith.addf %160, %165 : vector<8x256xf32>
    %167 = vector.broadcast %12 : f32 to vector<8x256xf32>
    %168 = arith.mulf %167, %81 : vector<8x256xf32>
    %169 = vector.broadcast %67 : f32 to vector<8x256xf32>
    %170 = arith.addf %169, %168 : vector<8x256xf32>
    %171 = vector.broadcast %44 : f32 to vector<8x256xf32>
    %172 = arith.mulf %171, %81 : vector<8x256xf32>
    %173 = vector.broadcast %75 : f32 to vector<8x256xf32>
    %174 = arith.addf %173, %172 : vector<8x256xf32>
    %175 = vector.broadcast %13 : f32 to vector<8x256xf32>
    %176 = arith.mulf %175, %83 : vector<8x256xf32>
    %177 = arith.addf %170, %176 : vector<8x256xf32>
    %178 = vector.broadcast %45 : f32 to vector<8x256xf32>
    %179 = arith.mulf %178, %83 : vector<8x256xf32>
    %180 = arith.addf %174, %179 : vector<8x256xf32>
    %181 = vector.broadcast %14 : f32 to vector<8x256xf32>
    %182 = arith.mulf %181, %85 : vector<8x256xf32>
    %183 = arith.addf %177, %182 : vector<8x256xf32>
    %184 = vector.broadcast %46 : f32 to vector<8x256xf32>
    %185 = arith.mulf %184, %85 : vector<8x256xf32>
    %186 = arith.addf %180, %185 : vector<8x256xf32>
    %187 = vector.broadcast %15 : f32 to vector<8x256xf32>
    %188 = arith.mulf %187, %87 : vector<8x256xf32>
    %189 = arith.addf %183, %188 : vector<8x256xf32>
    %190 = vector.broadcast %47 : f32 to vector<8x256xf32>
    %191 = arith.mulf %190, %87 : vector<8x256xf32>
    %192 = arith.addf %186, %191 : vector<8x256xf32>
    %193 = arith.mulf %111, %111 : vector<8x256xf32>
    %194 = arith.mulf %114, %114 : vector<8x256xf32>
    %195 = arith.mulf %137, %137 : vector<8x256xf32>
    %196 = arith.addf %193, %195 : vector<8x256xf32>
    %197 = arith.mulf %140, %140 : vector<8x256xf32>
    %198 = arith.addf %194, %197 : vector<8x256xf32>
    %199 = arith.mulf %163, %163 : vector<8x256xf32>
    %200 = arith.addf %196, %199 : vector<8x256xf32>
    %201 = arith.mulf %166, %166 : vector<8x256xf32>
    %202 = arith.addf %198, %201 : vector<8x256xf32>
    %203 = arith.mulf %189, %189 : vector<8x256xf32>
    %204 = arith.addf %200, %203 : vector<8x256xf32>
    %205 = arith.mulf %192, %192 : vector<8x256xf32>
    %206 = arith.addf %202, %205 : vector<8x256xf32>
    %207 = math.rsqrt %204 : vector<8x256xf32>
    %208 = math.rsqrt %206 : vector<8x256xf32>
    %209 = arith.mulf %111, %207 : vector<8x256xf32>
    %cst_28 = arith.constant dense<0.000000e+00> : vector<8xf32>
    %210 = vector.multi_reduction <add>, %209, %cst_28 [1] : vector<8x256xf32> to vector<8xf32>
    %211 = vector.shape_cast %210 : vector<8xf32> to vector<8x1xf32>
    %212 = vector.broadcast %211 : vector<8x1xf32> to vector<8x256xf32>
    %213 = arith.mulf %212, %114 : vector<8x256xf32>
    %214 = arith.mulf %137, %207 : vector<8x256xf32>
    %cst_29 = arith.constant dense<0.000000e+00> : vector<8xf32>
    %215 = vector.multi_reduction <add>, %214, %cst_29 [1] : vector<8x256xf32> to vector<8xf32>
    %216 = vector.shape_cast %215 : vector<8xf32> to vector<8x1xf32>
    %217 = vector.broadcast %216 : vector<8x1xf32> to vector<8x256xf32>
    %218 = arith.mulf %217, %140 : vector<8x256xf32>
    %219 = arith.addf %213, %218 : vector<8x256xf32>
    %220 = arith.mulf %163, %207 : vector<8x256xf32>
    %cst_30 = arith.constant dense<0.000000e+00> : vector<8xf32>
    %221 = vector.multi_reduction <add>, %220, %cst_30 [1] : vector<8x256xf32> to vector<8xf32>
    %222 = vector.shape_cast %221 : vector<8xf32> to vector<8x1xf32>
    %223 = vector.broadcast %222 : vector<8x1xf32> to vector<8x256xf32>
    %224 = arith.mulf %223, %166 : vector<8x256xf32>
    %225 = arith.addf %219, %224 : vector<8x256xf32>
    %226 = arith.mulf %189, %207 : vector<8x256xf32>
    %cst_31 = arith.constant dense<0.000000e+00> : vector<8xf32>
    %227 = vector.multi_reduction <add>, %226, %cst_31 [1] : vector<8x256xf32> to vector<8xf32>
    %228 = vector.shape_cast %227 : vector<8xf32> to vector<8x1xf32>
    %229 = vector.broadcast %228 : vector<8x1xf32> to vector<8x256xf32>
    %230 = arith.mulf %229, %192 : vector<8x256xf32>
    %231 = arith.addf %225, %230 : vector<8x256xf32>
    %232 = arith.mulf %208, %231 : vector<8x256xf32>
    %233 = arith.addf %88, %232 : vector<8x256xf32>
    %234 = vector.broadcast %16 : f32 to vector<8x256xf32>
    %235 = arith.mulf %234, %81 : vector<8x256xf32>
    %236 = vector.broadcast %68 : f32 to vector<8x256xf32>
    %237 = arith.addf %236, %235 : vector<8x256xf32>
    %238 = vector.broadcast %48 : f32 to vector<8x256xf32>
    %239 = arith.mulf %238, %81 : vector<8x256xf32>
    %240 = vector.broadcast %76 : f32 to vector<8x256xf32>
    %241 = arith.addf %240, %239 : vector<8x256xf32>
    %242 = vector.broadcast %17 : f32 to vector<8x256xf32>
    %243 = arith.mulf %242, %83 : vector<8x256xf32>
    %244 = arith.addf %237, %243 : vector<8x256xf32>
    %245 = vector.broadcast %49 : f32 to vector<8x256xf32>
    %246 = arith.mulf %245, %83 : vector<8x256xf32>
    %247 = arith.addf %241, %246 : vector<8x256xf32>
    %248 = vector.broadcast %18 : f32 to vector<8x256xf32>
    %249 = arith.mulf %248, %85 : vector<8x256xf32>
    %250 = arith.addf %244, %249 : vector<8x256xf32>
    %251 = vector.broadcast %50 : f32 to vector<8x256xf32>
    %252 = arith.mulf %251, %85 : vector<8x256xf32>
    %253 = arith.addf %247, %252 : vector<8x256xf32>
    %254 = vector.broadcast %19 : f32 to vector<8x256xf32>
    %255 = arith.mulf %254, %87 : vector<8x256xf32>
    %256 = arith.addf %250, %255 : vector<8x256xf32>
    %257 = vector.broadcast %51 : f32 to vector<8x256xf32>
    %258 = arith.mulf %257, %87 : vector<8x256xf32>
    %259 = arith.addf %253, %258 : vector<8x256xf32>
    %260 = vector.broadcast %20 : f32 to vector<8x256xf32>
    %261 = arith.mulf %260, %81 : vector<8x256xf32>
    %262 = vector.broadcast %69 : f32 to vector<8x256xf32>
    %263 = arith.addf %262, %261 : vector<8x256xf32>
    %264 = vector.broadcast %52 : f32 to vector<8x256xf32>
    %265 = arith.mulf %264, %81 : vector<8x256xf32>
    %266 = vector.broadcast %77 : f32 to vector<8x256xf32>
    %267 = arith.addf %266, %265 : vector<8x256xf32>
    %268 = vector.broadcast %21 : f32 to vector<8x256xf32>
    %269 = arith.mulf %268, %83 : vector<8x256xf32>
    %270 = arith.addf %263, %269 : vector<8x256xf32>
    %271 = vector.broadcast %53 : f32 to vector<8x256xf32>
    %272 = arith.mulf %271, %83 : vector<8x256xf32>
    %273 = arith.addf %267, %272 : vector<8x256xf32>
    %274 = vector.broadcast %22 : f32 to vector<8x256xf32>
    %275 = arith.mulf %274, %85 : vector<8x256xf32>
    %276 = arith.addf %270, %275 : vector<8x256xf32>
    %277 = vector.broadcast %54 : f32 to vector<8x256xf32>
    %278 = arith.mulf %277, %85 : vector<8x256xf32>
    %279 = arith.addf %273, %278 : vector<8x256xf32>
    %280 = vector.broadcast %23 : f32 to vector<8x256xf32>
    %281 = arith.mulf %280, %87 : vector<8x256xf32>
    %282 = arith.addf %276, %281 : vector<8x256xf32>
    %283 = vector.broadcast %55 : f32 to vector<8x256xf32>
    %284 = arith.mulf %283, %87 : vector<8x256xf32>
    %285 = arith.addf %279, %284 : vector<8x256xf32>
    %286 = vector.broadcast %24 : f32 to vector<8x256xf32>
    %287 = arith.mulf %286, %81 : vector<8x256xf32>
    %288 = vector.broadcast %70 : f32 to vector<8x256xf32>
    %289 = arith.addf %288, %287 : vector<8x256xf32>
    %290 = vector.broadcast %56 : f32 to vector<8x256xf32>
    %291 = arith.mulf %290, %81 : vector<8x256xf32>
    %292 = vector.broadcast %78 : f32 to vector<8x256xf32>
    %293 = arith.addf %292, %291 : vector<8x256xf32>
    %294 = vector.broadcast %25 : f32 to vector<8x256xf32>
    %295 = arith.mulf %294, %83 : vector<8x256xf32>
    %296 = arith.addf %289, %295 : vector<8x256xf32>
    %297 = vector.broadcast %57 : f32 to vector<8x256xf32>
    %298 = arith.mulf %297, %83 : vector<8x256xf32>
    %299 = arith.addf %293, %298 : vector<8x256xf32>
    %300 = vector.broadcast %26 : f32 to vector<8x256xf32>
    %301 = arith.mulf %300, %85 : vector<8x256xf32>
    %302 = arith.addf %296, %301 : vector<8x256xf32>
    %303 = vector.broadcast %58 : f32 to vector<8x256xf32>
    %304 = arith.mulf %303, %85 : vector<8x256xf32>
    %305 = arith.addf %299, %304 : vector<8x256xf32>
    %306 = vector.broadcast %27 : f32 to vector<8x256xf32>
    %307 = arith.mulf %306, %87 : vector<8x256xf32>
    %308 = arith.addf %302, %307 : vector<8x256xf32>
    %309 = vector.broadcast %59 : f32 to vector<8x256xf32>
    %310 = arith.mulf %309, %87 : vector<8x256xf32>
    %311 = arith.addf %305, %310 : vector<8x256xf32>
    %312 = vector.broadcast %28 : f32 to vector<8x256xf32>
    %313 = arith.mulf %312, %81 : vector<8x256xf32>
    %314 = vector.broadcast %71 : f32 to vector<8x256xf32>
    %315 = arith.addf %314, %313 : vector<8x256xf32>
    %316 = vector.broadcast %60 : f32 to vector<8x256xf32>
    %317 = arith.mulf %316, %81 : vector<8x256xf32>
    %318 = vector.broadcast %79 : f32 to vector<8x256xf32>
    %319 = arith.addf %318, %317 : vector<8x256xf32>
    %320 = vector.broadcast %29 : f32 to vector<8x256xf32>
    %321 = arith.mulf %320, %83 : vector<8x256xf32>
    %322 = arith.addf %315, %321 : vector<8x256xf32>
    %323 = vector.broadcast %61 : f32 to vector<8x256xf32>
    %324 = arith.mulf %323, %83 : vector<8x256xf32>
    %325 = arith.addf %319, %324 : vector<8x256xf32>
    %326 = vector.broadcast %30 : f32 to vector<8x256xf32>
    %327 = arith.mulf %326, %85 : vector<8x256xf32>
    %328 = arith.addf %322, %327 : vector<8x256xf32>
    %329 = vector.broadcast %62 : f32 to vector<8x256xf32>
    %330 = arith.mulf %329, %85 : vector<8x256xf32>
    %331 = arith.addf %325, %330 : vector<8x256xf32>
    %332 = vector.broadcast %31 : f32 to vector<8x256xf32>
    %333 = arith.mulf %332, %87 : vector<8x256xf32>
    %334 = arith.addf %328, %333 : vector<8x256xf32>
    %335 = vector.broadcast %63 : f32 to vector<8x256xf32>
    %336 = arith.mulf %335, %87 : vector<8x256xf32>
    %337 = arith.addf %331, %336 : vector<8x256xf32>
    %338 = arith.mulf %256, %256 : vector<8x256xf32>
    %339 = arith.mulf %259, %259 : vector<8x256xf32>
    %340 = arith.mulf %282, %282 : vector<8x256xf32>
    %341 = arith.addf %338, %340 : vector<8x256xf32>
    %342 = arith.mulf %285, %285 : vector<8x256xf32>
    %343 = arith.addf %339, %342 : vector<8x256xf32>
    %344 = arith.mulf %308, %308 : vector<8x256xf32>
    %345 = arith.addf %341, %344 : vector<8x256xf32>
    %346 = arith.mulf %311, %311 : vector<8x256xf32>
    %347 = arith.addf %343, %346 : vector<8x256xf32>
    %348 = arith.mulf %334, %334 : vector<8x256xf32>
    %349 = arith.addf %345, %348 : vector<8x256xf32>
    %350 = arith.mulf %337, %337 : vector<8x256xf32>
    %351 = arith.addf %347, %350 : vector<8x256xf32>
    %352 = math.rsqrt %349 : vector<8x256xf32>
    %353 = math.rsqrt %351 : vector<8x256xf32>
    %354 = arith.mulf %256, %352 : vector<8x256xf32>
    %cst_32 = arith.constant dense<0.000000e+00> : vector<8xf32>
    %355 = vector.multi_reduction <add>, %354, %cst_32 [1] : vector<8x256xf32> to vector<8xf32>
    %356 = vector.shape_cast %355 : vector<8xf32> to vector<8x1xf32>
    %357 = vector.broadcast %356 : vector<8x1xf32> to vector<8x256xf32>
    %358 = arith.mulf %357, %259 : vector<8x256xf32>
    %359 = arith.mulf %282, %352 : vector<8x256xf32>
    %cst_33 = arith.constant dense<0.000000e+00> : vector<8xf32>
    %360 = vector.multi_reduction <add>, %359, %cst_33 [1] : vector<8x256xf32> to vector<8xf32>
    %361 = vector.shape_cast %360 : vector<8xf32> to vector<8x1xf32>
    %362 = vector.broadcast %361 : vector<8x1xf32> to vector<8x256xf32>
    %363 = arith.mulf %362, %285 : vector<8x256xf32>
    %364 = arith.addf %358, %363 : vector<8x256xf32>
    %365 = arith.mulf %308, %352 : vector<8x256xf32>
    %cst_34 = arith.constant dense<0.000000e+00> : vector<8xf32>
    %366 = vector.multi_reduction <add>, %365, %cst_34 [1] : vector<8x256xf32> to vector<8xf32>
    %367 = vector.shape_cast %366 : vector<8xf32> to vector<8x1xf32>
    %368 = vector.broadcast %367 : vector<8x1xf32> to vector<8x256xf32>
    %369 = arith.mulf %368, %311 : vector<8x256xf32>
    %370 = arith.addf %364, %369 : vector<8x256xf32>
    %371 = arith.mulf %334, %352 : vector<8x256xf32>
    %cst_35 = arith.constant dense<0.000000e+00> : vector<8xf32>
    %372 = vector.multi_reduction <add>, %371, %cst_35 [1] : vector<8x256xf32> to vector<8xf32>
    %373 = vector.shape_cast %372 : vector<8xf32> to vector<8x1xf32>
    %374 = vector.broadcast %373 : vector<8x1xf32> to vector<8x256xf32>
    %375 = arith.mulf %374, %337 : vector<8x256xf32>
    %376 = arith.addf %370, %375 : vector<8x256xf32>
    %377 = arith.mulf %353, %376 : vector<8x256xf32>
    %378 = arith.addf %233, %377 : vector<8x256xf32>
    %cst_36 = arith.constant 0.001953125 : f32
    %379 = vector.broadcast %cst_36 : f32 to vector<8x256xf32>
    %380 = arith.mulf %378, %379 : vector<8x256xf32>
    %cst_37 = arith.constant dense<0xFF800000> : vector<8xf32>
    %381 = vector.multi_reduction <maximumf>, %380, %cst_37 [1] : vector<8x256xf32> to vector<8xf32>
    %382 = vector.shape_cast %381 : vector<8xf32> to vector<8x1xf32>
    %383 = vector.broadcast %382 : vector<8x1xf32> to vector<8x256xf32>
    %384 = arith.subf %380, %383 : vector<8x256xf32>
    %385 = math.exp %384 : vector<8x256xf32>
    %cst_38 = arith.constant dense<0.000000e+00> : vector<8xf32>
    %386 = vector.multi_reduction <add>, %385, %cst_38 [1] : vector<8x256xf32> to vector<8xf32>
    %387 = vector.shape_cast %386 : vector<8xf32> to vector<8x1xf32>
    %388 = tpu.reciprocal %387 {approx = true} : vector<8x1xf32> -> vector<8x1xf32>
    %389 = vector.broadcast %388 : vector<8x1xf32> to vector<8x256xf32>
    %390 = arith.mulf %385, %389 : vector<8x256xf32>
    %cst_39 = arith.constant 0.0204081628 : f32
    %391 = vector.broadcast %cst_39 : f32 to vector<8x256xf32>
    %392 = arith.mulf %81, %391 : vector<8x256xf32>
    %c0_40 = arith.constant 0 : index
    %c0_41 = arith.constant 0 : index
    %c0_42 = arith.constant 0 : index
    %393 = vector.load %arg4[%c0_40, %c0_41, %c0_42] : memref<8x8x256xf32, #tpu.memory_space<vmem>>, vector<1x8x256xf32>
    %394 = vector.shape_cast %393 : vector<1x8x256xf32> to vector<8x256xf32>
    %395 = vector.shape_cast %392 : vector<8x256xf32> to vector<1x8x256xf32>
    tpu.vector_store %arg4[%c0_40, %c0_41, %c0_42], %395 {strides = array<i32>} : memref<8x8x256xf32, #tpu.memory_space<vmem>>, vector<1x8x256xf32>,
    %396 = arith.mulf %81, %390 : vector<8x256xf32>
    %c4_43 = arith.constant 4 : index
    %c0_44 = arith.constant 0 : index
    %c0_45 = arith.constant 0 : index
    %397 = vector.load %arg4[%c4_43, %c0_44, %c0_45] : memref<8x8x256xf32, #tpu.memory_space<vmem>>, vector<1x8x256xf32>
    %398 = vector.shape_cast %397 : vector<1x8x256xf32> to vector<8x256xf32>
    %399 = vector.shape_cast %396 : vector<8x256xf32> to vector<1x8x256xf32>
    tpu.vector_store %arg4[%c4_43, %c0_44, %c0_45], %399 {strides = array<i32>} : memref<8x8x256xf32, #tpu.memory_space<vmem>>, vector<1x8x256xf32>,
    %cst_46 = arith.constant 0.0204081628 : f32
    %400 = vector.broadcast %cst_46 : f32 to vector<8x256xf32>
    %401 = arith.mulf %83, %400 : vector<8x256xf32>
    %c1_47 = arith.constant 1 : index
    %c0_48 = arith.constant 0 : index
    %c0_49 = arith.constant 0 : index
    %402 = vector.load %arg4[%c1_47, %c0_48, %c0_49] : memref<8x8x256xf32, #tpu.memory_space<vmem>>, vector<1x8x256xf32>
    %403 = vector.shape_cast %402 : vector<1x8x256xf32> to vector<8x256xf32>
    %404 = vector.shape_cast %401 : vector<8x256xf32> to vector<1x8x256xf32>
    tpu.vector_store %arg4[%c1_47, %c0_48, %c0_49], %404 {strides = array<i32>} : memref<8x8x256xf32, #tpu.memory_space<vmem>>, vector<1x8x256xf32>,
    %405 = arith.mulf %83, %390 : vector<8x256xf32>
    %c5_50 = arith.constant 5 : index
    %c0_51 = arith.constant 0 : index
    %c0_52 = arith.constant 0 : index
    %406 = vector.load %arg4[%c5_50, %c0_51, %c0_52] : memref<8x8x256xf32, #tpu.memory_space<vmem>>, vector<1x8x256xf32>
    %407 = vector.shape_cast %406 : vector<1x8x256xf32> to vector<8x256xf32>
    %408 = vector.shape_cast %405 : vector<8x256xf32> to vector<1x8x256xf32>
    tpu.vector_store %arg4[%c5_50, %c0_51, %c0_52], %408 {strides = array<i32>} : memref<8x8x256xf32, #tpu.memory_space<vmem>>, vector<1x8x256xf32>,
    %cst_53 = arith.constant 0.0204081628 : f32
    %409 = vector.broadcast %cst_53 : f32 to vector<8x256xf32>
    %410 = arith.mulf %85, %409 : vector<8x256xf32>
    %c2_54 = arith.constant 2 : index
    %c0_55 = arith.constant 0 : index
    %c0_56 = arith.constant 0 : index
    %411 = vector.load %arg4[%c2_54, %c0_55, %c0_56] : memref<8x8x256xf32, #tpu.memory_space<vmem>>, vector<1x8x256xf32>
    %412 = vector.shape_cast %411 : vector<1x8x256xf32> to vector<8x256xf32>
    %413 = vector.shape_cast %410 : vector<8x256xf32> to vector<1x8x256xf32>
    tpu.vector_store %arg4[%c2_54, %c0_55, %c0_56], %413 {strides = array<i32>} : memref<8x8x256xf32, #tpu.memory_space<vmem>>, vector<1x8x256xf32>,
    %414 = arith.mulf %85, %390 : vector<8x256xf32>
    %c6_57 = arith.constant 6 : index
    %c0_58 = arith.constant 0 : index
    %c0_59 = arith.constant 0 : index
    %415 = vector.load %arg4[%c6_57, %c0_58, %c0_59] : memref<8x8x256xf32, #tpu.memory_space<vmem>>, vector<1x8x256xf32>
    %416 = vector.shape_cast %415 : vector<1x8x256xf32> to vector<8x256xf32>
    %417 = vector.shape_cast %414 : vector<8x256xf32> to vector<1x8x256xf32>
    tpu.vector_store %arg4[%c6_57, %c0_58, %c0_59], %417 {strides = array<i32>} : memref<8x8x256xf32, #tpu.memory_space<vmem>>, vector<1x8x256xf32>,
    %cst_60 = arith.constant 0.0204081628 : f32
    %418 = vector.broadcast %cst_60 : f32 to vector<8x256xf32>
    %419 = arith.mulf %87, %418 : vector<8x256xf32>
    %c3_61 = arith.constant 3 : index
    %c0_62 = arith.constant 0 : index
    %c0_63 = arith.constant 0 : index
    %420 = vector.load %arg4[%c3_61, %c0_62, %c0_63] : memref<8x8x256xf32, #tpu.memory_space<vmem>>, vector<1x8x256xf32>
    %421 = vector.shape_cast %420 : vector<1x8x256xf32> to vector<8x256xf32>
    %422 = vector.shape_cast %419 : vector<8x256xf32> to vector<1x8x256xf32>
    tpu.vector_store %arg4[%c3_61, %c0_62, %c0_63], %422 {strides = array<i32>} : memref<8x8x256xf32, #tpu.memory_space<vmem>>, vector<1x8x256xf32>,
    %423 = arith.mulf %87, %390 : vector<8x256xf32>
    %c7_64 = arith.constant 7 : index
    %c0_65 = arith.constant 0 : index
    %c0_66 = arith.constant 0 : index
    %424 = vector.load %arg4[%c7_64, %c0_65, %c0_66] : memref<8x8x256xf32, #tpu.memory_space<vmem>>, vector<1x8x256xf32>
    %425 = vector.shape_cast %424 : vector<1x8x256xf32> to vector<8x256xf32>
    %426 = vector.shape_cast %423 : vector<8x256xf32> to vector<1x8x256xf32>
    tpu.vector_store %arg4[%c7_64, %c0_65, %c0_66], %426 {strides = array<i32>} : memref<8x8x256xf32, #tpu.memory_space<vmem>>, vector<1x8x256xf32>,
    return
  }
  func.func @transform_0(%arg0: i32) -> i32 {
    %c0_i32 = arith.constant 0 : i32
    %c0_i32_0 = arith.constant 0 : i32
    return %c0_i32 : i32
  }
  func.func @transform_1(%arg0: i32) -> i32 {
    %c0_i32 = arith.constant 0 : i32
    %c0_i32_0 = arith.constant 0 : i32
    return %c0_i32 : i32
  }
  func.func @transform_2(%arg0: i32) -> (i32, i32, i32) {
    %c0_i32 = arith.constant 0 : i32
    %c0_i32_0 = arith.constant 0 : i32
    %c0_i32_1 = arith.constant 0 : i32
    return %c0_i32, %arg0, %c0_i32_0 : i32, i32, i32
  }
  func.func @transform_3(%arg0: i32) -> (i32, i32, i32) {
    %c0_i32 = arith.constant 0 : i32
    %c0_i32_0 = arith.constant 0 : i32
    %c0_i32_1 = arith.constant 0 : i32
    return %c0_i32, %arg0, %c0_i32_0 : i32, i32, i32
  }
}

</mosaic_0001>

<llo_original>
// kernel: tpu_custom_call.1
$region0: #{tpu_custom_call.1}
  #allocation0 [shape = 'u32[]', space=smem, size = 0x4, offset = 0x4, fixed_abs, tag = 'smem constant byte address 0x4 - core index']
  #allocation1 [shape = 'u32[144,128]{1,0:T(1,128)}', space=vmem, size = 0x12000, scoped, tag = 'internal scratch']
  %s0 = inlined_call_operand.hbm [shape: f32[64], index: 0, kind: input, shape index: {}]
  %s1 = inlined_call_operand.vmem [shape: f32[16], index: 1, kind: input, shape index: {}]
  %s2 = inlined_call_operand.hbm [shape: f32[4,8,256], index: 2, kind: input, shape index: {}]
  %s3 = inlined_call_operand.hbm [shape: f32[8,8,256], index: 3, kind: output, shape index: {}]
  %s4 = sld [smem:[#allocation0]]
  $region34: #{tpu_custom_call.1} parent=0
    _
  %s6 = ssub.s32 1, %s4
  %s7 = scalar_select 0, %s6, %s4
  $region1: #{tpu_custom_call.1} parent=0
    #allocation2 [shape = 'u8[512]{0}', space=smem, size = 0x200, scoped, tag = 'input window, operand 0, single buffered']
    #allocation3 [shape = 's32[1]{0}', space=sflag, size = 0x4, scoped, tag = 'scoped memory for tpu_custom_call.1']
    #allocation4 [shape = 's32[1]{0}', space=sflag, size = 0x4, scoped, tag = 'scoped memory for tpu_custom_call.1']
    #allocation5 [shape = 's32[1]{0}', space=sflag, size = 0x4, scoped, tag = 'scoped memory for tpu_custom_call.1']
    #allocation6 [shape = 's32[1]{0}', space=sflag, size = 0x4, scoped, tag = 'scoped memory for tpu_custom_call.1']
    #allocation7 [shape = 'u8[512]{0}', space=smem, size = 0x200, scoped, tag = 'input window, operand 1, single buffered']
    #allocation8 [shape = 'u8[32768]{0}', space=vmem, size = 0x8000, scoped, tag = 'input window, operand 2, single buffered']
    #allocation9 [shape = 'u8[65536]{0}', space=vmem, size = 0x10000, scoped, tag = 'output window, operand 0, single buffered']
    %8 = vsyncpa [#allocation5], 0
    %9 = vsyncpa [#allocation6], 0
    %10 = vsyncpa [#allocation3], 0
    %11 = vsyncpa [#allocation4], 0
    // Predicated region
    $region2: #{tpu_custom_call.1} parent=1 // pred_check
      _
    $region3: #{tpu_custom_call.1} parent=1 // pred_check_branch
      %13 = sbr.rel (0) target = $region5
    $region4: #{tpu_custom_call.1} parent=1 // pred_region
      %s15 = ssub.s32 16, 16
      %16 = vsyncadd [#allocation5], %s15
      %19 = dma.hbm_to_smem %s0, 16, [#allocation2], [#allocation5]
    $region5: #{tpu_custom_call.1} parent=1 // pred_fallthru
      _
    // Predicated region
    $region6: #{tpu_custom_call.1} parent=1 // pred_check
      _
    $region7: #{tpu_custom_call.1} parent=1 // pred_check_branch
      %21 = sbr.rel (0) target = $region9
    $region8: #{tpu_custom_call.1} parent=1 // pred_region
      %s23 = ssub.s32 16, 16
      %24 = vsyncadd [#allocation6], %s23
      %s26 = sshll.u32 %s1, 4
      %s27 = int_to_ptr.vmem [resolvable:$true] %s26
      %29 = dma.vmem_to_smem %s27, 16, [#allocation7], [#allocation6]
    $region9: #{tpu_custom_call.1} parent=1 // pred_fallthru
      _
    // Predicated region
    $region10: #{tpu_custom_call.1} parent=1 // pred_check
      _
    $region11: #{tpu_custom_call.1} parent=1 // pred_check_branch
      %31 = sbr.rel (0) target = $region13
    $region12: #{tpu_custom_call.1} parent=1 // pred_region
      %s33 = ssub.s32 1024, 1024
      %34 = vsyncadd [#allocation3], %s33
      %s35 = sshll.u32 [#allocation8], 4
      %s36 = int_to_ptr.vmem [resolvable:$true] %s35
      %41 = dma.hbm_to_vmem [thread:$0]  %s2, 1024, %s36, [#allocation3], 256, 256, 16
    $region13: #{tpu_custom_call.1} parent=1 // pred_fallthru
      _
    // Predicated region
    $region14: #{tpu_custom_call.1} parent=1 // pred_check
      _
    $region15: #{tpu_custom_call.1} parent=1 // pred_check_branch
      %43 = sbr.rel (0) target = $region17
    $region16: #{tpu_custom_call.1} parent=1 // pred_region
      %44 = dma.done [#allocation5], 16
    $region17: #{tpu_custom_call.1} parent=1 // pred_fallthru
      _
    // Predicated region
    $region18: #{tpu_custom_call.1} parent=1 // pred_check
      _
    $region19: #{tpu_custom_call.1} parent=1 // pred_check_branch
      %46 = sbr.rel (0) target = $region21
    $region20: #{tpu_custom_call.1} parent=1 // pred_region
      %47 = dma.done [#allocation6], 16
    $region21: #{tpu_custom_call.1} parent=1 // pred_fallthru
      _
    // Predicated region
    $region22: #{tpu_custom_call.1} parent=1 // pred_check
      _
    $region23: #{tpu_custom_call.1} parent=1 // pred_check_branch
      %49 = sbr.rel (0) target = $region25
    $region24: #{tpu_custom_call.1} parent=1 // pred_region
      %50 = dma.done [#allocation3], 1024
    $region25: #{tpu_custom_call.1} parent=1 // pred_fallthru
      _
    %51 = sfence
    %s52 = sld [smem:[#allocation2]]
    %s53 = sld [smem:[#allocation2 + $0x1]]
    %s54 = sld [smem:[#allocation2 + $0x2]]
    %s55 = sld [smem:[#allocation2 + $0x3]]
    %s56 = sld [smem:[#allocation2 + $0x4]]
    %s57 = sld [smem:[#allocation2 + $0x5]]
    %s58 = sld [smem:[#allocation2 + $0x6]]
    %s59 = sld [smem:[#allocation2 + $0x7]]
    %s60 = sld [smem:[#allocation2 + $0x8]]
    %s61 = sld [smem:[#allocation2 + $0x9]]
    %s62 = sld [smem:[#allocation2 + $0xa]]
    %s63 = sld [smem:[#allocation2 + $0xb]]
    %s64 = sld [smem:[#allocation2 + $0xc]]
    %s65 = sld [smem:[#allocation2 + $0xd]]
    %s66 = sld [smem:[#allocation2 + $0xe]]
    %s67 = sld [smem:[#allocation2 + $0xf]]
    %s68 = sld [smem:[#allocation2 + $0x10]]
    %s69 = sld [smem:[#allocation2 + $0x11]]
    %s70 = sld [smem:[#allocation2 + $0x12]]
    %s71 = sld [smem:[#allocation2 + $0x13]]
    %s72 = sld [smem:[#allocation2 + $0x14]]
    %s73 = sld [smem:[#allocation2 + $0x15]]
    %s74 = sld [smem:[#allocation2 + $0x16]]
    %s75 = sld [smem:[#allocation2 + $0x17]]
    %s76 = sld [smem:[#allocation2 + $0x18]]
    %s77 = sld [smem:[#allocation2 + $0x19]]
    %s78 = sld [smem:[#allocation2 + $0x1a]]
    %s79 = sld [smem:[#allocation2 + $0x1b]]
    %s80 = sld [smem:[#allocation2 + $0x1c]]
    %s81 = sld [smem:[#allocation2 + $0x1d]]
    %s82 = sld [smem:[#allocation2 + $0x1e]]
    %s83 = sld [smem:[#allocation2 + $0x1f]]
    %s84 = sld [smem:[#allocation2 + $0x20]]
    %s85 = sld [smem:[#allocation2 + $0x21]]
    %s86 = sld [smem:[#allocation2 + $0x22]]
    %s87 = sld [smem:[#allocation2 + $0x23]]
    %s88 = sld [smem:[#allocation2 + $0x24]]
    %s89 = sld [smem:[#allocation2 + $0x25]]
    %s90 = sld [smem:[#allocation2 + $0x26]]
    %s91 = sld [smem:[#allocation2 + $0x27]]
    %s92 = sld [smem:[#allocation2 + $0x28]]
    %s93 = sld [smem:[#allocation2 + $0x29]]
    %s94 = sld [smem:[#allocation2 + $0x2a]]
    %s95 = sld [smem:[#allocation2 + $0x2b]]
    %s96 = sld [smem:[#allocation2 + $0x2c]]
    %s97 = sld [smem:[#allocation2 + $0x2d]]
    %s98 = sld [smem:[#allocation2 + $0x2e]]
    %s99 = sld [smem:[#allocation2 + $0x2f]]
    %s100 = sld [smem:[#allocation2 + $0x30]]
    %s101 = sld [smem:[#allocation2 + $0x31]]
    %s102 = sld [smem:[#allocation2 + $0x32]]
    %s103 = sld [smem:[#allocation2 + $0x33]]
    %s104 = sld [smem:[#allocation2 + $0x34]]
    %s105 = sld [smem:[#allocation2 + $0x35]]
    %s106 = sld [smem:[#allocation2 + $0x36]]
    %s107 = sld [smem:[#allocation2 + $0x37]]
    %s108 = sld [smem:[#allocation2 + $0x38]]
    %s109 = sld [smem:[#allocation2 + $0x39]]
    %s110 = sld [smem:[#allocation2 + $0x3a]]
    %s111 = sld [smem:[#allocation2 + $0x3b]]
    %s112 = sld [smem:[#allocation2 + $0x3c]]
    %s113 = sld [smem:[#allocation2 + $0x3d]]
    %s114 = sld [smem:[#allocation2 + $0x3e]]
    %s115 = sld [smem:[#allocation2 + $0x3f]]
    %s116 = sld [smem:[#allocation7]]
    %s117 = sld [smem:[#allocation7 + $0x1]]
    %s118 = sld [smem:[#allocation7 + $0x2]]
    %s119 = sld [smem:[#allocation7 + $0x3]]
    %s120 = sld [smem:[#allocation7 + $0x4]]
    %s121 = sld [smem:[#allocation7 + $0x5]]
    %s122 = sld [smem:[#allocation7 + $0x6]]
    %s123 = sld [smem:[#allocation7 + $0x7]]
    %s124 = sld [smem:[#allocation7 + $0x8]]
    %s125 = sld [smem:[#allocation7 + $0x9]]
    %s126 = sld [smem:[#allocation7 + $0xa]]
    %s127 = sld [smem:[#allocation7 + $0xb]]
    %s128 = sld [smem:[#allocation7 + $0xc]]
    %s129 = sld [smem:[#allocation7 + $0xd]]
    %s130 = sld [smem:[#allocation7 + $0xe]]
    %s131 = sld [smem:[#allocation7 + $0xf]]
    %v132 = vld [vmem:[#allocation8] sm:$0xff]
    %v133 = vld [vmem:[#allocation8 + $0x8] sm:$0xff]
    %s134 = scalar_lea.vmem [#allocation8], 16
    %v135 = vld [vmem:[%s134] sm:$0xff]
    %v136 = vld [vmem:[%s134 + $0x8] sm:$0xff]
    %s137 = scalar_lea.vmem [#allocation8], 32
    %v138 = vld [vmem:[%s137] sm:$0xff]
    %v139 = vld [vmem:[%s137 + $0x8] sm:$0xff]
    %s140 = scalar_lea.vmem [#allocation8], 48
    %v141 = vld [vmem:[%s140] sm:$0xff]
    %v142 = vld [vmem:[%s140 + $0x8] sm:$0xff]
    %v143 = vstv %s52
    %v144 = vmul.f32 %v143, %v132
    %v145 = vmul.f32 %v143, %v133
    %v146 = vstv %s116
    %v147 = vadd.f32 %v146, %v144
    %v148 = vadd.f32 %v146, %v145
    %v149 = vstv %s84
    %v150 = vmul.f32 %v149, %v132
    %v151 = vmul.f32 %v149, %v133
    %v152 = vstv %s124
    %v153 = vadd.f32 %v152, %v150
    %v154 = vadd.f32 %v152, %v151
    %v155 = vstv %s53
    %v156 = vmul.f32 %v155, %v135
    %v157 = vmul.f32 %v155, %v136
    %v158 = vadd.f32 %v147, %v156
    %v159 = vadd.f32 %v148, %v157
    %v160 = vstv %s85
    %v161 = vmul.f32 %v160, %v135
    %v162 = vmul.f32 %v160, %v136
    %v163 = vadd.f32 %v153, %v161
    %v164 = vadd.f32 %v154, %v162
    %v165 = vstv %s54
    %v166 = vmul.f32 %v165, %v138
    %v167 = vmul.f32 %v165, %v139
    %v168 = vadd.f32 %v158, %v166
    %v169 = vadd.f32 %v159, %v167
    %v170 = vstv %s86
    %v171 = vmul.f32 %v170, %v138
    %v172 = vmul.f32 %v170, %v139
    %v173 = vadd.f32 %v163, %v171
    %v174 = vadd.f32 %v164, %v172
    %v175 = vstv %s55
    %v176 = vmul.f32 %v175, %v141
    %v177 = vmul.f32 %v175, %v142
    %v178 = vadd.f32 %v168, %v176
    %v179 = vadd.f32 %v169, %v177
    %v180 = vstv %s87
    %v181 = vmul.f32 %v180, %v141
    %v182 = vmul.f32 %v180, %v142
    %v183 = vadd.f32 %v173, %v181
    %v184 = vadd.f32 %v174, %v182
    %v185 = vstv %s56
    %v186 = vmul.f32 %v185, %v132
    %v187 = vmul.f32 %v185, %v133
    %v188 = vstv %s117
    %v189 = vadd.f32 %v188, %v186
    %v190 = vadd.f32 %v188, %v187
    %v191 = vstv %s88
    %v192 = vmul.f32 %v191, %v132
    %v193 = vmul.f32 %v191, %v133
    %v194 = vstv %s125
    %v195 = vadd.f32 %v194, %v192
    %v196 = vadd.f32 %v194, %v193
    %v197 = vstv %s57
    %v198 = vmul.f32 %v197, %v135
    %v199 = vmul.f32 %v197, %v136
    %v200 = vadd.f32 %v189, %v198
    %v201 = vadd.f32 %v190, %v199
    %v202 = vstv %s89
    %v203 = vmul.f32 %v202, %v135
    %v204 = vmul.f32 %v202, %v136
    %v205 = vadd.f32 %v195, %v203
    %v206 = vadd.f32 %v196, %v204
    %v207 = vstv %s58
    %v208 = vmul.f32 %v207, %v138
    %v209 = vmul.f32 %v207, %v139
    %v210 = vadd.f32 %v200, %v208
    %v211 = vadd.f32 %v201, %v209
    %v212 = vstv %s90
    %v213 = vmul.f32 %v212, %v138
    %v214 = vmul.f32 %v212, %v139
    %v215 = vadd.f32 %v205, %v213
    %v216 = vadd.f32 %v206, %v214
    %v217 = vstv %s59
    %v218 = vmul.f32 %v217, %v141
    %v219 = vmul.f32 %v217, %v142
    %v220 = vadd.f32 %v210, %v218
    %v221 = vadd.f32 %v211, %v219
    %v222 = vstv %s91
    %v223 = vmul.f32 %v222, %v141
    %v224 = vmul.f32 %v222, %v142
    %v225 = vadd.f32 %v215, %v223
    %v226 = vadd.f32 %v216, %v224
    %v227 = vstv %s60
    %v228 = vmul.f32 %v227, %v132
    %v229 = vmul.f32 %v227, %v133
    %v230 = vstv %s118
    %v231 = vadd.f32 %v230, %v228
    %v232 = vadd.f32 %v230, %v229
    %v233 = vstv %s92
    %v234 = vmul.f32 %v233, %v132
    %v235 = vmul.f32 %v233, %v133
    %v236 = vstv %s126
    %v237 = vadd.f32 %v236, %v234
    %v238 = vadd.f32 %v236, %v235
    %v239 = vstv %s61
    %v240 = vmul.f32 %v239, %v135
    %v241 = vmul.f32 %v239, %v136
    %v242 = vadd.f32 %v231, %v240
    %v243 = vadd.f32 %v232, %v241
    %v244 = vstv %s93
    %v245 = vmul.f32 %v244, %v135
    %v246 = vmul.f32 %v244, %v136
    %v247 = vadd.f32 %v237, %v245
    %v248 = vadd.f32 %v238, %v246
    %v249 = vstv %s62
    %v250 = vmul.f32 %v249, %v138
    %v251 = vmul.f32 %v249, %v139
    %v252 = vadd.f32 %v242, %v250
    %v253 = vadd.f32 %v243, %v251
    %v254 = vstv %s94
    %v255 = vmul.f32 %v254, %v138
    %v256 = vmul.f32 %v254, %v139
    %v257 = vadd.f32 %v247, %v255
    %v258 = vadd.f32 %v248, %v256
    %v259 = vstv %s63
    %v260 = vmul.f32 %v259, %v141
    %v261 = vmul.f32 %v259, %v142
    %v262 = vadd.f32 %v252, %v260
    %v263 = vadd.f32 %v253, %v261
    %v264 = vstv %s95
    %v265 = vmul.f32 %v264, %v141
    %v266 = vmul.f32 %v264, %v142
    %v267 = vadd.f32 %v257, %v265
    %v268 = vadd.f32 %v258, %v266
    %v269 = vstv %s64
    %v270 = vmul.f32 %v269, %v132
    %v271 = vmul.f32 %v269, %v133
    %v272 = vstv %s119
    %v273 = vadd.f32 %v272, %v270
    %v274 = vadd.f32 %v272, %v271
    %v275 = vstv %s96
    %v276 = vmul.f32 %v275, %v132
    %v277 = vmul.f32 %v275, %v133
    %v278 = vstv %s127
    %v279 = vadd.f32 %v278, %v276
    %v280 = vadd.f32 %v278, %v277
    %v281 = vstv %s65
    %v282 = vmul.f32 %v281, %v135
    %v283 = vmul.f32 %v281, %v136
    %v284 = vadd.f32 %v273, %v282
    %v285 = vadd.f32 %v274, %v283
    %v286 = vstv %s97
    %v287 = vmul.f32 %v286, %v135
    %v288 = vmul.f32 %v286, %v136
    %v289 = vadd.f32 %v279, %v287
    %v290 = vadd.f32 %v280, %v288
    %v291 = vstv %s66
    %v292 = vmul.f32 %v291, %v138
    %v293 = vmul.f32 %v291, %v139
    %v294 = vadd.f32 %v284, %v292
    %v295 = vadd.f32 %v285, %v293
    %v296 = vstv %s98
    %v297 = vmul.f32 %v296, %v138
    %v298 = vmul.f32 %v296, %v139
    %v299 = vadd.f32 %v289, %v297
    %v300 = vadd.f32 %v290, %v298
    %v301 = vstv %s67
    %v302 = vmul.f32 %v301, %v141
    %v303 = vmul.f32 %v301, %v142
    %v304 = vadd.f32 %v294, %v302
    %v305 = vadd.f32 %v295, %v303
    %v306 = vstv %s99
    %v307 = vmul.f32 %v306, %v141
    %v308 = vmul.f32 %v306, %v142
    %v309 = vadd.f32 %v299, %v307
    %v310 = vadd.f32 %v300, %v308
    %v311 = vmul.f32 %v178, %v178
    %v312 = vmul.f32 %v179, %v179
    %v313 = vmul.f32 %v183, %v183
    %v314 = vmul.f32 %v184, %v184
    %v315 = vmul.f32 %v220, %v220
    %v316 = vmul.f32 %v221, %v221
    %v317 = vadd.f32 %v311, %v315
    %v318 = vadd.f32 %v312, %v316
    %v319 = vmul.f32 %v225, %v225
    %v320 = vmul.f32 %v226, %v226
    %v321 = vadd.f32 %v313, %v319
    %v322 = vadd.f32 %v314, %v320
    %v323 = vmul.f32 %v262, %v262
    %v324 = vmul.f32 %v263, %v263
    %v325 = vadd.f32 %v317, %v323
    %v326 = vadd.f32 %v318, %v324
    %v327 = vmul.f32 %v267, %v267
    %v328 = vmul.f32 %v268, %v268
    %v329 = vadd.f32 %v321, %v327
    %v330 = vadd.f32 %v322, %v328
    %v331 = vmul.f32 %v304, %v304
    %v332 = vmul.f32 %v305, %v305
    %v333 = vadd.f32 %v325, %v331
    %v334 = vadd.f32 %v326, %v332
    %v335 = vmul.f32 %v309, %v309
    %v336 = vmul.f32 %v310, %v310
    %v337 = vadd.f32 %v329, %v335
    %v338 = vadd.f32 %v330, %v336
    %v339 = vrsqrt.pop %v333
    %v340 = vrsqrt.pop %v334
    %v341 = vrsqrt.pop %v337
    %v342 = vrsqrt.pop %v338
    %v343 = vmul.f32 %v178, %v339
    %v344 = vmul.f32 %v179, %v340
    %v345 = vadd.f32 %v343, %v344
    %346 = vadd.xlane.f32.xlu0 %v345
    %v347 = vpop.xlane.xlu0 %346
    %v348 = vmul.f32 %v347, %v183
    %v349 = vmul.f32 %v347, %v184
    %v350 = vmul.f32 %v220, %v339
    %v351 = vmul.f32 %v221, %v340
    %v352 = vadd.f32 %v350, %v351
    %353 = vadd.xlane.f32.xlu0 %v352
    %v354 = vpop.xlane.xlu0 %353
    %v355 = vmul.f32 %v354, %v225
    %v356 = vmul.f32 %v354, %v226
    %v357 = vadd.f32 %v348, %v355
    %v358 = vadd.f32 %v349, %v356
    %v359 = vmul.f32 %v262, %v339
    %v360 = vmul.f32 %v263, %v340
    %v361 = vadd.f32 %v359, %v360
    %362 = vadd.xlane.f32.xlu0 %v361
    %v363 = vpop.xlane.xlu0 %362
    %v364 = vmul.f32 %v363, %v267
    %v365 = vmul.f32 %v363, %v268
    %v366 = vadd.f32 %v357, %v364
    %v367 = vadd.f32 %v358, %v365
    %v368 = vmul.f32 %v304, %v339
    %v369 = vmul.f32 %v305, %v340
    %v370 = vadd.f32 %v368, %v369
    %371 = vadd.xlane.f32.xlu0 %v370
    %v372 = vpop.xlane.xlu0 %371
    %v373 = vmul.f32 %v372, %v309
    %v374 = vmul.f32 %v372, %v310
    %v375 = vadd.f32 %v366, %v373
    %v376 = vadd.f32 %v367, %v374
    %v377 = vmul.f32 %v341, %v375
    %v378 = vmul.f32 %v342, %v376
    %v379 = vadd.f32 %v377, 0.0
    %v380 = vadd.f32 %v378, 0.0
    %v381 = vstv %s68
    %v382 = vmul.f32 %v381, %v132
    %v383 = vmul.f32 %v381, %v133
    %v384 = vstv %s120
    %v385 = vadd.f32 %v384, %v382
    %v386 = vadd.f32 %v384, %v383
    %v387 = vstv %s100
    %v388 = vmul.f32 %v387, %v132
    %v389 = vmul.f32 %v387, %v133
    %v390 = vstv %s128
    %v391 = vadd.f32 %v390, %v388
    %v392 = vadd.f32 %v390, %v389
    %v393 = vstv %s69
    %v394 = vmul.f32 %v393, %v135
    %v395 = vmul.f32 %v393, %v136
    %v396 = vadd.f32 %v385, %v394
    %v397 = vadd.f32 %v386, %v395
    %v398 = vstv %s101
    %v399 = vmul.f32 %v398, %v135
    %v400 = vmul.f32 %v398, %v136
    %v401 = vadd.f32 %v391, %v399
    %v402 = vadd.f32 %v392, %v400
    %v403 = vstv %s70
    %v404 = vmul.f32 %v403, %v138
    %v405 = vmul.f32 %v403, %v139
    %v406 = vadd.f32 %v396, %v404
    %v407 = vadd.f32 %v397, %v405
    %v408 = vstv %s102
    %v409 = vmul.f32 %v408, %v138
    %v410 = vmul.f32 %v408, %v139
    %v411 = vadd.f32 %v401, %v409
    %v412 = vadd.f32 %v402, %v410
    %v413 = vstv %s71
    %v414 = vmul.f32 %v413, %v141
    %v415 = vmul.f32 %v413, %v142
    %v416 = vadd.f32 %v406, %v414
    %v417 = vadd.f32 %v407, %v415
    %v418 = vstv %s103
    %v419 = vmul.f32 %v418, %v141
    %v420 = vmul.f32 %v418, %v142
    %v421 = vadd.f32 %v411, %v419
    %v422 = vadd.f32 %v412, %v420
    %v423 = vstv %s72
    %v424 = vmul.f32 %v423, %v132
    %v425 = vmul.f32 %v423, %v133
    %v426 = vstv %s121
    %v427 = vadd.f32 %v426, %v424
    %v428 = vadd.f32 %v426, %v425
    %v429 = vstv %s104
    %v430 = vmul.f32 %v429, %v132
    %v431 = vmul.f32 %v429, %v133
    %v432 = vstv %s129
    %v433 = vadd.f32 %v432, %v430
    %v434 = vadd.f32 %v432, %v431
    %v435 = vstv %s73
    %v436 = vmul.f32 %v435, %v135
    %v437 = vmul.f32 %v435, %v136
    %v438 = vadd.f32 %v427, %v436
    %v439 = vadd.f32 %v428, %v437
    %v440 = vstv %s105
    %v441 = vmul.f32 %v440, %v135
    %v442 = vmul.f32 %v440, %v136
    %v443 = vadd.f32 %v433, %v441
    %v444 = vadd.f32 %v434, %v442
    %v445 = vstv %s74
    %v446 = vmul.f32 %v445, %v138
    %v447 = vmul.f32 %v445, %v139
    %v448 = vadd.f32 %v438, %v446
    %v449 = vadd.f32 %v439, %v447
    %v450 = vstv %s106
    %v451 = vmul.f32 %v450, %v138
    %v452 = vmul.f32 %v450, %v139
    %v453 = vadd.f32 %v443, %v451
    %v454 = vadd.f32 %v444, %v452
    %v455 = vstv %s75
    %v456 = vmul.f32 %v455, %v141
    %v457 = vmul.f32 %v455, %v142
    %v458 = vadd.f32 %v448, %v456
    %v459 = vadd.f32 %v449, %v457
    %v460 = vstv %s107
    %v461 = vmul.f32 %v460, %v141
    %v462 = vmul.f32 %v460, %v142
    %v463 = vadd.f32 %v453, %v461
    %v464 = vadd.f32 %v454, %v462
    %v465 = vstv %s76
    %v466 = vmul.f32 %v465, %v132
    %v467 = vmul.f32 %v465, %v133
    %v468 = vstv %s122
    %v469 = vadd.f32 %v468, %v466
    %v470 = vadd.f32 %v468, %v467
    %v471 = vstv %s108
    %v472 = vmul.f32 %v471, %v132
    %v473 = vmul.f32 %v471, %v133
    %v474 = vstv %s130
    %v475 = vadd.f32 %v474, %v472
    %v476 = vadd.f32 %v474, %v473
    %v477 = vstv %s77
    %v478 = vmul.f32 %v477, %v135
    %v479 = vmul.f32 %v477, %v136
    %v480 = vadd.f32 %v469, %v478
    %v481 = vadd.f32 %v470, %v479
    %v482 = vstv %s109
    %v483 = vmul.f32 %v482, %v135
    %v484 = vmul.f32 %v482, %v136
    %v485 = vadd.f32 %v475, %v483
    %v486 = vadd.f32 %v476, %v484
    %v487 = vstv %s78
    %v488 = vmul.f32 %v487, %v138
    %v489 = vmul.f32 %v487, %v139
    %v490 = vadd.f32 %v480, %v488
    %v491 = vadd.f32 %v481, %v489
    %v492 = vstv %s110
    %v493 = vmul.f32 %v492, %v138
    %v494 = vmul.f32 %v492, %v139
    %v495 = vadd.f32 %v485, %v493
    %v496 = vadd.f32 %v486, %v494
    %v497 = vstv %s79
    %v498 = vmul.f32 %v497, %v141
    %v499 = vmul.f32 %v497, %v142
    %v500 = vadd.f32 %v490, %v498
    %v501 = vadd.f32 %v491, %v499
    %v502 = vstv %s111
    %v503 = vmul.f32 %v502, %v141
    %v504 = vmul.f32 %v502, %v142
    %v505 = vadd.f32 %v495, %v503
    %v506 = vadd.f32 %v496, %v504
    %v507 = vstv %s80
    %v508 = vmul.f32 %v507, %v132
    %v509 = vmul.f32 %v507, %v133
    %v510 = vstv %s123
    %v511 = vadd.f32 %v510, %v508
    %v512 = vadd.f32 %v510, %v509
    %v513 = vstv %s112
    %v514 = vmul.f32 %v513, %v132
    %v515 = vmul.f32 %v513, %v133
    %v516 = vstv %s131
    %v517 = vadd.f32 %v516, %v514
    %v518 = vadd.f32 %v516, %v515
    %v519 = vstv %s81
    %v520 = vmul.f32 %v519, %v135
    %v521 = vmul.f32 %v519, %v136
    %v522 = vadd.f32 %v511, %v520
    %v523 = vadd.f32 %v512, %v521
    %v524 = vstv %s113
    %v525 = vmul.f32 %v524, %v135
    %v526 = vmul.f32 %v524, %v136
    %v527 = vadd.f32 %v517, %v525
    %v528 = vadd.f32 %v518, %v526
    %v529 = vstv %s82
    %v530 = vmul.f32 %v529, %v138
    %v531 = vmul.f32 %v529, %v139
    %v532 = vadd.f32 %v522, %v530
    %v533 = vadd.f32 %v523, %v531
    %v534 = vstv %s114
    %v535 = vmul.f32 %v534, %v138
    %v536 = vmul.f32 %v534, %v139
    %v537 = vadd.f32 %v527, %v535
    %v538 = vadd.f32 %v528, %v536
    %v539 = vstv %s83
    %v540 = vmul.f32 %v539, %v141
    %v541 = vmul.f32 %v539, %v142
    %v542 = vadd.f32 %v532, %v540
    %v543 = vadd.f32 %v533, %v541
    %v544 = vstv %s115
    %v545 = vmul.f32 %v544, %v141
    %v546 = vmul.f32 %v544, %v142
    %v547 = vadd.f32 %v537, %v545
    %v548 = vadd.f32 %v538, %v546
    %v549 = vmul.f32 %v416, %v416
    %v550 = vmul.f32 %v417, %v417
    %v551 = vmul.f32 %v421, %v421
    %v552 = vmul.f32 %v422, %v422
    %v553 = vmul.f32 %v458, %v458
    %v554 = vmul.f32 %v459, %v459
    %v555 = vadd.f32 %v549, %v553
    %v556 = vadd.f32 %v550, %v554
    %v557 = vmul.f32 %v463, %v463
    %v558 = vmul.f32 %v464, %v464
    %v559 = vadd.f32 %v551, %v557
    %v560 = vadd.f32 %v552, %v558
    %v561 = vmul.f32 %v500, %v500
    %v562 = vmul.f32 %v501, %v501
    %v563 = vadd.f32 %v555, %v561
    %v564 = vadd.f32 %v556, %v562
    %v565 = vmul.f32 %v505, %v505
    %v566 = vmul.f32 %v506, %v506
    %v567 = vadd.f32 %v559, %v565
    %v568 = vadd.f32 %v560, %v566
    %v569 = vmul.f32 %v542, %v542
    %v570 = vmul.f32 %v543, %v543
    %v571 = vadd.f32 %v563, %v569
    %v572 = vadd.f32 %v564, %v570
    %v573 = vmul.f32 %v547, %v547
    %v574 = vmul.f32 %v548, %v548
    %v575 = vadd.f32 %v567, %v573
    %v576 = vadd.f32 %v568, %v574
    %v577 = vrsqrt.pop %v571
    %v578 = vrsqrt.pop %v572
    %v579 = vrsqrt.pop %v575
    %v580 = vrsqrt.pop %v576
    %v581 = vmul.f32 %v416, %v577
    %v582 = vmul.f32 %v417, %v578
    %v583 = vadd.f32 %v581, %v582
    %584 = vadd.xlane.f32.xlu0 %v583
    %v585 = vpop.xlane.xlu0 %584
    %v586 = vmul.f32 %v585, %v421
    %v587 = vmul.f32 %v585, %v422
    %v588 = vmul.f32 %v458, %v577
    %v589 = vmul.f32 %v459, %v578
    %v590 = vadd.f32 %v588, %v589
    %591 = vadd.xlane.f32.xlu0 %v590
    %v592 = vpop.xlane.xlu0 %591
    %v593 = vmul.f32 %v592, %v463
    %v594 = vmul.f32 %v592, %v464
    %v595 = vadd.f32 %v586, %v593
    %v596 = vadd.f32 %v587, %v594
    %v597 = vmul.f32 %v500, %v577
    %v598 = vmul.f32 %v501, %v578
    %v599 = vadd.f32 %v597, %v598
    %600 = vadd.xlane.f32.xlu0 %v599
    %v601 = vpop.xlane.xlu0 %600
    %v602 = vmul.f32 %v601, %v505
    %v603 = vmul.f32 %v601, %v506
    %v604 = vadd.f32 %v595, %v602
    %v605 = vadd.f32 %v596, %v603
    %v606 = vmul.f32 %v542, %v577
    %v607 = vmul.f32 %v543, %v578
    %v608 = vadd.f32 %v606, %v607
    %609 = vadd.xlane.f32.xlu0 %v608
    %v610 = vpop.xlane.xlu0 %609
    %v611 = vmul.f32 %v610, %v547
    %v612 = vmul.f32 %v610, %v548
    %v613 = vadd.f32 %v604, %v611
    %v614 = vadd.f32 %v605, %v612
    %v615 = vmul.f32 %v579, %v613
    %v616 = vmul.f32 %v580, %v614
    %v617 = vadd.f32 %v379, %v615
    %v618 = vadd.f32 %v380, %v616
    %v619 = vmul.f32 %v617, 0.001953125
    %v620 = vmul.f32 %v618, 0.001953125
    %v621 = vmax.f32 %v619, %v620
    %622 = vmax.xlane.f32.xlu0 %v621
    %v623 = vpop.xlane.xlu0 %622
    %v624 = vsub.f32 %v619, %v623
    %v625 = vsub.f32 %v620, %v623
    %v626 = vmul.f32 %v624, 1.442695
    %v627 = vpow.pop %v626
    %v628 = vmul.f32 %v625, 1.442695
    %v629 = vpow.pop %v628
    %v630 = vadd.f32 %v627, %v629
    %631 = vadd.xlane.f32.xlu0 %v630
    %v632 = vpop.xlane.xlu0 %631
    %v633 = vrcp.pop %v632
    %v634 = vmul.f32 %v627, %v633
    %v635 = vmul.f32 %v629, %v633
    %v636 = vmul.f32 %v132, 0.020408163
    %v637 = vmul.f32 %v133, 0.020408163
    %638 = vst [vmem:[#allocation9] sm:$0xff] %v636
    %639 = vst [vmem:[#allocation9 + $0x8] sm:$0xff] %v637
    %v640 = vmul.f32 %v132, %v634
    %v641 = vmul.f32 %v133, %v635
    %s642 = scalar_lea.vmem [#allocation9], 64
    %643 = vst [vmem:[%s642] sm:$0xff] %v640
    %644 = vst [vmem:[%s642 + $0x8] sm:$0xff] %v641
    %v645 = vmul.f32 %v135, 0.020408163
    %v646 = vmul.f32 %v136, 0.020408163
    %s647 = scalar_lea.vmem [#allocation9], 16
    %648 = vst [vmem:[%s647] sm:$0xff] %v645
    %649 = vst [vmem:[%s647 + $0x8] sm:$0xff] %v646
    %v650 = vmul.f32 %v135, %v634
    %v651 = vmul.f32 %v136, %v635
    %s652 = scalar_lea.vmem [#allocation9], 80
    %653 = vst [vmem:[%s652] sm:$0xff] %v650
    %654 = vst [vmem:[%s652 + $0x8] sm:$0xff] %v651
    %v655 = vmul.f32 %v138, 0.020408163
    %v656 = vmul.f32 %v139, 0.020408163
    %s657 = scalar_lea.vmem [#allocation9], 32
    %658 = vst [vmem:[%s657] sm:$0xff] %v655
    %659 = vst [vmem:[%s657 + $0x8] sm:$0xff] %v656
    %v660 = vmul.f32 %v138, %v634
    %v661 = vmul.f32 %v139, %v635
    %s662 = scalar_lea.vmem [#allocation9], 96
    %663 = vst [vmem:[%s662] sm:$0xff] %v660
    %664 = vst [vmem:[%s662 + $0x8] sm:$0xff] %v661
    %v665 = vmul.f32 %v141, 0.020408163
    %v666 = vmul.f32 %v142, 0.020408163
    %s667 = scalar_lea.vmem [#allocation9], 48
    %668 = vst [vmem:[%s667] sm:$0xff] %v665
    %669 = vst [vmem:[%s667 + $0x8] sm:$0xff] %v666
    %v670 = vmul.f32 %v141, %v634
    %v671 = vmul.f32 %v142, %v635
    %s672 = scalar_lea.vmem [#allocation9], 112
    %673 = vst [vmem:[%s672] sm:$0xff] %v670
    %674 = vst [vmem:[%s672 + $0x8] sm:$0xff] %v671
    // Predicated region
    $region26: #{tpu_custom_call.1} parent=1 // pred_check
      _
    $region27: #{tpu_custom_call.1} parent=1 // pred_check_branch
      %676 = sbr.rel (0) target = $region29
    $region28: #{tpu_custom_call.1} parent=1 // pred_region
      %s678 = ssub.s32 2048, 2048
      %679 = vsyncadd [#allocation4], %s678
      %s680 = sshll.u32 [#allocation9], 4
      %s681 = int_to_ptr.vmem [resolvable:$true] %s680
      %686 = dma.vmem_to_hbm [thread:$0]  %s681, 2048, %s3, [#allocation4], 256, 256, 16
    $region29: #{tpu_custom_call.1} parent=1 // pred_fallthru
      _
    // Predicated region
    $region30: #{tpu_custom_call.1} parent=1 // pred_check
      _
    $region31: #{tpu_custom_call.1} parent=1 // pred_check_branch
      %688 = sbr.rel (0) target = $region33
    $region32: #{tpu_custom_call.1} parent=1 // pred_region
      %689 = dma.done [#allocation4], 2048
    $region33: #{tpu_custom_call.1} parent=1 // pred_fallthru
      _
    %690 = vsyncpa [#allocation3], 1
    %691 = vsyncpa [#allocation4], 1
    %692 = vsyncpa [#allocation5], 1
    %693 = vsyncpa [#allocation6], 1

</llo_original>
